<compile_context>
chip_gen: v6e
topology: v6e:2x2x1
jax: 0.10.0
libtpu: 0.0.40
codegen_flags: <defaults>
</compile_context>

<pallas_src>
import functools

import jax
import jax.numpy as jnp
from jax import lax
from jax.experimental import pallas as pl
from jax.experimental.pallas import tpu as pltpu

_LANE = 128       # lane width (last dim)
_SUBLANE = 8      # sublane width (second-to-last dim)
_INV_SQRT2 = 0.7071067811865476
_SQRT_2_OVER_PI = 0.7978845608028654


def _round_up(x, m):
    return (x + m - 1) // m * m


def _gelu(x, approx=False):
    if approx:
        # tanh form: transcendental lands on the EUP slot (useful when VALU
        # binds on small-C stages).  Numerics differ from torch.nn.GELU default.
        return 0.5 * x * (1.0 + jnp.tanh(_SQRT_2_OVER_PI * (x + 0.044715 * x * x * x)))
    # Exact erf-based GELU: matches torch.nn.GELU() default.
    return 0.5 * x * (1.0 + lax.erf(x * _INV_SQRT2))


def _pipeline_mode_supported():
    try:
        pl.BlockSpec((_SUBLANE, _LANE), lambda i: (0, 0),
                     pipeline_mode=pl.Buffered(buffer_count=1))
        return True
    except Exception:
        return False


_SINGLE_BUFFER_OK = _pipeline_mode_supported()


def _const_spec(shape):
    """Grid-invariant block: single VMEM copy when pipeline_mode is available.

    On fallback (older jax) the weights become double-buffered; the caller's
    VMEM budget accounts for that explicitly (no silent footprint blow-up).
    """
    zeros = (0,) * len(shape)
    index_map = lambda i: zeros
    if _SINGLE_BUFFER_OK:
        return pl.BlockSpec(shape, index_map,
                            pipeline_mode=pl.Buffered(buffer_count=1))
    return pl.BlockSpec(shape, index_map)


def _vmem_capacity_bytes():
    try:
        return int(pltpu.get_tpu_info().vmem_capacity_bytes)
    except Exception:
        return 64 * 1024 * 1024   # conservative default (v7x per-TensorCore VMEM)


def _mlp_kernel(x_ref, w1_ref, b1_ref, w2_ref, b2_ref, o_ref, acc_ref, *,
                approx_gelu):
    n_hc = w1_ref.shape[0]   # static number of hidden chunks

    def chunk(j):
        # fc1 on one hidden chunk: native-dtype operands into the MXU,
        # f32 accumulation; bias + GELU in f32 on the VPU/EUP.
        h = jnp.dot(x_ref[...], w1_ref[j], preferred_element_type=jnp.float32)
        h = _gelu(h + b1_ref[j].astype(jnp.float32), approx=approx_gelu)
        # fc2 partial product for this chunk (operands in weight dtype).
        return jnp.dot(h.astype(w2_ref.dtype), w2_ref[j],
                       preferred_element_type=jnp.float32)

    if n_hc == 1:
        y = chunk(0)
    else:
        acc_ref[...] = chunk(0)

        def body(j, carry):
            acc_ref[...] += chunk(j)
            return carry

        lax.fori_loop(1, n_hc, body, 0, unroll=False)
        y = acc_ref[...]

    o_ref[...] = (y + b2_ref[...].astype(jnp.float32)).astype(o_ref.dtype)
    # TODO(synk): nn.Dropout with drop>0 would need pltpu.prng_seed /
    # pltpu.prng_random_bits masking here (drop=0.0 in the module -> identity).


def mlp_pallas(x, w1, b1, w2, b2, *, tm=512, hidden_chunk=512,
               approx_gelu=False, vmem_cap_bytes=None):
    """Fused Mlp forward.

    x: (B, N, C_in) activations (f32 or bf16).
    w1: (C_in, H), b1: (H,), w2: (H, C_out), b2: (C_out,).
    """
    B, N, C_in = x.shape
    H = w1.shape[1]
    C_out = w2.shape[1]
    M = B * N

    # ---- hidden-dim chunking: caps the f32 (tm, hc) intermediate so a large
    #      tm still fits v7x's 64 MiB VMEM at Swin stage-4 (H=3072). ----
    H_p = _round_up(H, _LANE)
    n_hc = max(1, pl.cdiv(H_p, _round_up(hidden_chunk, _LANE)))
    hc = _round_up(pl.cdiv(H_p, n_hc), _LANE)
    H_pp = n_hc * hc

    # ---- row tile (clamped to the token count, multiple of 8) ----
    tm = max(_SUBLANE, _round_up(min(tm, _round_up(M, _SUBLANE)), _SUBLANE))

    act_bytes = jnp.dtype(x.dtype).itemsize
    w_bytes = jnp.dtype(w1.dtype).itemsize
    w_buf = 1 if _SINGLE_BUFFER_OK else 2    # double the weight term on fallback

    def vmem_needed(tm_):
        return int(
            2 * tm_ * C_in * act_bytes                          # x tiles (2-buffered)
            + 2 * tm_ * C_out * act_bytes                       # out tiles
            + w_buf * (C_in * H_pp + H_pp * C_out) * w_bytes    # w1 + w2 (resident)
            + w_buf * (n_hc * _SUBLANE * hc + C_out) * w_bytes  # b1 (sublane pad) + b2
            + tm_ * C_out * 4                                   # f32 accumulator scratch
            + 2 * tm_ * hc * 4                                  # f32 hidden-chunk temps
        )

    capacity = vmem_cap_bytes if vmem_cap_bytes is not None else _vmem_capacity_bytes()
    usable = max(int(0.85 * capacity), 32 << 20)
    margin = 6 << 20
    while vmem_needed(tm) + margin > usable and tm > _SUBLANE:
        tm = max(_SUBLANE, _round_up(tm // 2, _SUBLANE))
    vmem_limit = int(max(16 << 20, min(usable, vmem_needed(tm) + margin)))

    # ---- host-side prep: activations are only reshaped (no pad, no copy);
    #      only the small weight/bias tensors are padded & chunk-reshaped. ----
    x2 = x.reshape(M, C_in)
    w1_c = jnp.pad(w1, ((0, 0), (0, H_pp - H))).reshape(C_in, n_hc, hc).transpose(1, 0, 2)
    b1_c = jnp.pad(b1, (0, H_pp - H)).reshape(n_hc, 1, hc)
    w2_c = jnp.pad(w2, ((0, H_pp - H), (0, 0))).reshape(n_hc, hc, C_out)
    b2_c = b2.reshape(1, C_out)
    # (zero-padded hidden columns: GELU(0 + 0) = 0, times zero w2 rows -> exact.)

    grid_m = pl.cdiv(M, tm)   # ragged last tile handled by Pallas OOB masking

    cost = pl.CostEstimate(
        flops=2 * M * (C_in * H + H * C_out),
        transcendentals=M * H,
        bytes_accessed=int(M * C_in * act_bytes + M * C_out * act_bytes
                           + (C_in * H_pp + H_pp * C_out + H_pp + C_out) * w_bytes),
    )

    kernel = functools.partial(_mlp_kernel, approx_gelu=approx_gelu)

    out = pl.pallas_call(
        kernel,
        out_shape=jax.ShapeDtypeStruct((M, C_out), x.dtype),
        grid_spec=pltpu.PrefetchScalarGridSpec(
            num_scalar_prefetch=0,
            grid=(grid_m,),
            in_specs=[
                pl.BlockSpec((tm, C_in), lambda i: (i, 0)),   # activations
                _const_spec((n_hc, C_in, hc)),                # w1 (chunked, resident)
                _const_spec((n_hc, 1, hc)),                   # b1
                _const_spec((n_hc, hc, C_out)),               # w2 (chunked, resident)
                _const_spec((1, C_out)),                      # b2
            ],
            out_specs=pl.BlockSpec((tm, C_out), lambda i: (i, 0)),
            scratch_shapes=[pltpu.VMEM((tm, C_out), jnp.float32)],
        ),
        compiler_params=pltpu.CompilerParams(
            dimension_semantics=("parallel",),
            vmem_limit_bytes=vmem_limit,
        ),
        cost_estimate=cost,
    )(x2, w1_c, b1_c, w2_c, b2_c)

    return out.reshape(B, N, C_out)


def mlp_reference(x, w1, b1, w2, b2):
    h = jnp.einsum("bnc,ch->bnh", x, w1) + b1
    h = 0.5 * h * (1.0 + lax.erf(h * _INV_SQRT2))
    return jnp.einsum("bnh,ho->bno", h, w2) + b2


if __name__ == "__main__":
    key = jax.random.PRNGKey(0)

    # --- test 1: Swin-block Mlp, f32 (erf GELU matches torch.nn.GELU) ---
    B, N, C_in, H, C_out = 2, 64, 32, 64, 32
    kx, kw1, kb1, kw2, kb2 = jax.random.split(key, 5)
    x = jax.random.normal(kx, (B, N, C_in), dtype=jnp.float32)
    w1 = jax.random.normal(kw1, (C_in, H), dtype=jnp.float32) * 0.02
    b1 = jax.random.normal(kb1, (H,), dtype=jnp.float32) * 0.01
    w2 = jax.random.normal(kw2, (H, C_out), dtype=jnp.float32) * 0.02
    b2 = jax.random.normal(kb2, (C_out,), dtype=jnp.float32) * 0.01

    out = jax.block_until_ready(mlp_pallas(x, w1, b1, w2, b2))
    ref = mlp_reference(x, w1, b1, w2, b2)
    assert out.shape == (B, N, C_out)
    assert jnp.allclose(out, ref, atol=1e-5, rtol=1e-5)

    # --- test 2: bf16 operands straight into the MXU (f32 accumulate) ---
    xb, w1b, w2b = (t.astype(jnp.bfloat16) for t in (x, w1, w2))
    b1b, b2b = b1.astype(jnp.bfloat16), b2.astype(jnp.bfloat16)
    out_b = jax.block_until_ready(mlp_pallas(xb, w1b, b1b, w2b, b2b))
    ref_b = mlp_reference(*(t.astype(jnp.float32) for t in (xb, w1b, b1b, w2b, b2b)))
    assert out_b.shape == (B, N, C_out) and out_b.dtype == jnp.bfloat16
    assert jnp.allclose(out_b.astype(jnp.float32), ref_b, atol=2e-2, rtol=1e-1)

    # --- test 3: ragged token count (no host padding of activations), multiple
    #     row tiles and the multi-chunk hidden accumulation path ---
    B3, N3, C3, H3, O3 = 2, 50, 24, 272, 40
    k3 = jax.random.split(key, 6)
    x3 = jax.random.normal(k3[0], (B3, N3, C3), dtype=jnp.float32)
    w13 = jax.random.normal(k3[1], (C3, H3), dtype=jnp.float32) * 0.05
    b13 = jax.random.normal(k3[2], (H3,), dtype=jnp.float32) * 0.01
    w23 = jax.random.normal(k3[3], (H3, O3), dtype=jnp.float32) * 0.05
    b23 = jax.random.normal(k3[4], (O3,), dtype=jnp.float32) * 0.01
    out3 = jax.block_until_ready(
        mlp_pallas(x3, w13, b13, w23, b23, tm=64, hidden_chunk=128))
    ref3 = mlp_reference(x3, w13, b13, w23, b23)
    assert out3.shape == (B3, N3, O3)
    assert jnp.allclose(out3, ref3, atol=2e-3, rtol=2e-2)

    print("KERNEL_OK")
</pallas_src>

<mosaic_0001>
module attributes {stable_mosaic.version = 11 : i64} {
  func.func @_mlp_kernel(%arg0: i32, %arg1: memref<128x32xf32, #tpu.memory_space<vmem>>, %arg2: memref<1x32x128xf32, #tpu.memory_space<vmem>>, %arg3: memref<1x1x128xf32, #tpu.memory_space<vmem>>, %arg4: memref<1x128x32xf32, #tpu.memory_space<vmem>>, %arg5: memref<1x32xf32, #tpu.memory_space<vmem>>, %arg6: memref<128x32xf32, #tpu.memory_space<vmem>>, %arg7: memref<128x32xf32, #tpu.memory_space<vmem>>) attributes {dimension_semantics = [#tpu.dimension_semantics<parallel>], iteration_bounds = array<i64: 1>, scalar_prefetch = 0 : i64, scratch_operands = 1 : i64, tpu.core_type = #tpu.core_type<tc>, window_params = [{transform_indices = @transform_0, window_bounds = array<i64: 128, 32>}, {pipeline_mode = #tpu.pipeline_mode<synchronous>, transform_indices = @transform_1, window_bounds = array<i64: 1, 32, 128>}, {pipeline_mode = #tpu.pipeline_mode<synchronous>, transform_indices = @transform_2, window_bounds = array<i64: 1, 1, 128>}, {pipeline_mode = #tpu.pipeline_mode<synchronous>, transform_indices = @transform_3, window_bounds = array<i64: 1, 128, 32>}, {pipeline_mode = #tpu.pipeline_mode<synchronous>, transform_indices = @transform_4, window_bounds = array<i64: 1, 32>}, {transform_indices = @transform_5, window_bounds = array<i64: 128, 32>}]} {
    %c0 = arith.constant 0 : index
    %c0_0 = arith.constant 0 : index
    %0 = vector.load %arg1[%c0, %c0_0] : memref<128x32xf32, #tpu.memory_space<vmem>>, vector<128x32xf32>
    %c0_1 = arith.constant 0 : index
    %c0_2 = arith.constant 0 : index
    %c0_3 = arith.constant 0 : index
    %1 = vector.load %arg2[%c0_1, %c0_2, %c0_3] : memref<1x32x128xf32, #tpu.memory_space<vmem>>, vector<1x32x128xf32>
    %2 = vector.shape_cast %1 : vector<1x32x128xf32> to vector<32x128xf32>
    %cst = arith.constant dense<0.000000e+00> : vector<128x128xf32>
    %3 = tpu.matmul %0, %2, %cst {dimension_numbers = #tpu.dot_dimension_numbers<[1], [0], [0], [1], [0, 0, 1, 1], [], []>} : vector<128x32xf32>, vector<32x128xf32>, vector<128x128xf32> -> vector<128x128xf32>
    %c0_4 = arith.constant 0 : index
    %c0_5 = arith.constant 0 : index
    %c0_6 = arith.constant 0 : index
    %4 = vector.load %arg3[%c0_4, %c0_5, %c0_6] : memref<1x1x128xf32, #tpu.memory_space<vmem>>, vector<1x1x128xf32>
    %5 = vector.shape_cast %4 : vector<1x1x128xf32> to vector<1x128xf32>
    %6 = vector.broadcast %5 : vector<1x128xf32> to vector<128x128xf32>
    %7 = arith.addf %3, %6 : vector<128x128xf32>
    %cst_7 = arith.constant 5.000000e-01 : f32
    %8 = vector.broadcast %cst_7 : f32 to vector<128x128xf32>
    %9 = arith.mulf %8, %7 : vector<128x128xf32>
    %cst_8 = arith.constant 0.707106769 : f32
    %10 = vector.broadcast %cst_8 : f32 to vector<128x128xf32>
    %11 = arith.mulf %7, %10 : vector<128x128xf32>
    %12 = math.erf %11 : vector<128x128xf32>
    %cst_9 = arith.constant 1.000000e+00 : f32
    %13 = vector.broadcast %cst_9 : f32 to vector<128x128xf32>
    %14 = arith.addf %13, %12 : vector<128x128xf32>
    %15 = arith.mulf %9, %14 : vector<128x128xf32>
    %c0_10 = arith.constant 0 : index
    %c0_11 = arith.constant 0 : index
    %c0_12 = arith.constant 0 : index
    %16 = vector.load %arg4[%c0_10, %c0_11, %c0_12] : memref<1x128x32xf32, #tpu.memory_space<vmem>>, vector<1x128x32xf32>
    %17 = vector.shape_cast %16 : vector<1x128x32xf32> to vector<128x32xf32>
    %cst_13 = arith.constant dense<0.000000e+00> : vector<128x32xf32>
    %18 = tpu.matmul %15, %17, %cst_13 {dimension_numbers = #tpu.dot_dimension_numbers<[1], [0], [0], [1], [0, 0, 1, 1], [], []>} : vector<128x128xf32>, vector<128x32xf32>, vector<128x32xf32> -> vector<128x32xf32>
    %c0_14 = arith.constant 0 : index
    %c0_15 = arith.constant 0 : index
    %19 = vector.load %arg5[%c0_14, %c0_15] : memref<1x32xf32, #tpu.memory_space<vmem>>, vector<1x32xf32>
    %20 = vector.broadcast %19 : vector<1x32xf32> to vector<128x32xf32>
    %21 = arith.addf %18, %20 : vector<128x32xf32>
    %c0_16 = arith.constant 0 : index
    %c0_17 = arith.constant 0 : index
    %22 = vector.load %arg6[%c0_16, %c0_17] : memref<128x32xf32, #tpu.memory_space<vmem>>, vector<128x32xf32>
    tpu.vector_store %arg6[%c0_16, %c0_17], %21 {strides = array<i32>} : memref<128x32xf32, #tpu.memory_space<vmem>>, vector<128x32xf32>,
    return
  }
  func.func @transform_0(%arg0: i32) -> (i32, i32) {
    %c0_i32 = arith.constant 0 : i32
    %c0_i32_0 = arith.constant 0 : i32
    return %arg0, %c0_i32 : i32, i32
  }
  func.func @transform_1(%arg0: i32) -> (i32, i32, i32) {
    %c0_i32 = arith.constant 0 : i32
    %c0_i32_0 = arith.constant 0 : i32
    %c0_i32_1 = arith.constant 0 : i32
    %c0_i32_2 = arith.constant 0 : i32
    return %c0_i32, %c0_i32_0, %c0_i32_1 : i32, i32, i32
  }
  func.func @transform_2(%arg0: i32) -> (i32, i32, i32) {
    %c0_i32 = arith.constant 0 : i32
    %c0_i32_0 = arith.constant 0 : i32
    %c0_i32_1 = arith.constant 0 : i32
    %c0_i32_2 = arith.constant 0 : i32
    return %c0_i32, %c0_i32_0, %c0_i32_1 : i32, i32, i32
  }
  func.func @transform_3(%arg0: i32) -> (i32, i32, i32) {
    %c0_i32 = arith.constant 0 : i32
    %c0_i32_0 = arith.constant 0 : i32
    %c0_i32_1 = arith.constant 0 : i32
    %c0_i32_2 = arith.constant 0 : i32
    return %c0_i32, %c0_i32_0, %c0_i32_1 : i32, i32, i32
  }
  func.func @transform_4(%arg0: i32) -> (i32, i32) {
    %c0_i32 = arith.constant 0 : i32
    %c0_i32_0 = arith.constant 0 : i32
    %c0_i32_1 = arith.constant 0 : i32
    return %c0_i32, %c0_i32_0 : i32, i32
  }
  func.func @transform_5(%arg0: i32) -> (i32, i32) {
    %c0_i32 = arith.constant 0 : i32
    %c0_i32_0 = arith.constant 0 : i32
    return %arg0, %c0_i32 : i32, i32
  }
}

</mosaic_0001>

<llo_original>
// kernel: tpu_custom_call.1
$region0: #{tpu_custom_call.1}
  #allocation0 [shape = 'u32[]', space=smem, size = 0x4, offset = 0x4, fixed_abs, tag = 'smem constant byte address 0x4 - core index']
  #allocation1 [shape = 'u32[144,128]{1,0:T(1,128)}', space=vmem, size = 0x12000, scoped, tag = 'internal scratch']
  #allocation2 [shape = 'f32[128,32]{1,0:T(8,128)}', space=vmem, size = 0x10000, scoped, tag = 'scratch operand']
  %s0 = inlined_call_operand.vmem [shape: f32[128,32], index: 0, kind: input, shape index: {}]
  %s1 = inlined_call_operand.vmem [shape: f32[1,32,128], index: 1, kind: input, shape index: {}]
  %s2 = inlined_call_operand.vmem [shape: f32[1,1,128], index: 2, kind: input, shape index: {}]
  %s3 = inlined_call_operand.vmem [shape: f32[1,128,32], index: 3, kind: input, shape index: {}]
  %s4 = inlined_call_operand.vmem [shape: f32[1,32], index: 4, kind: input, shape index: {}]
  %s5 = inlined_call_operand.vmem [shape: f32[128,32], index: 5, kind: output, shape index: {}]
  %s6 = sld [smem:[#allocation0]]
  $region30: #{tpu_custom_call.1} parent=0
    _
  %s8 = ssub.s32 1, %s6
  %s9 = scalar_select 0, %s8, %s6
  // Predicated region
  $region2: #{tpu_custom_call.1} parent=0 // pred_check
    _
  $region3: #{tpu_custom_call.1} parent=0 // pred_check_branch
    %11 = sbr.rel (0) target = $region5
  $region4: #{tpu_custom_call.1} parent=0 // pred_region
    _
  $region5: #{tpu_custom_call.1} parent=0 // pred_fallthru
    _
  // Predicated region
  $region6: #{tpu_custom_call.1} parent=0 // pred_check
    _
  $region7: #{tpu_custom_call.1} parent=0 // pred_check_branch
    %13 = sbr.rel (0) target = $region9
  $region8: #{tpu_custom_call.1} parent=0 // pred_region
    _
  $region9: #{tpu_custom_call.1} parent=0 // pred_fallthru
    _
  // Predicated region
  $region10: #{tpu_custom_call.1} parent=0 // pred_check
    _
  $region11: #{tpu_custom_call.1} parent=0 // pred_check_branch
    %15 = sbr.rel (0) target = $region13
  $region12: #{tpu_custom_call.1} parent=0 // pred_region
    _
  $region13: #{tpu_custom_call.1} parent=0 // pred_fallthru
    _
  // Predicated region
  $region14: #{tpu_custom_call.1} parent=0 // pred_check
    _
  $region15: #{tpu_custom_call.1} parent=0 // pred_check_branch
    %17 = sbr.rel (0) target = $region17
  $region16: #{tpu_custom_call.1} parent=0 // pred_region
    _
  $region17: #{tpu_custom_call.1} parent=0 // pred_fallthru
    _
  // Predicated region
  $region18: #{tpu_custom_call.1} parent=0 // pred_check
    _
  $region19: #{tpu_custom_call.1} parent=0 // pred_check_branch
    %19 = sbr.rel (0) target = $region21
  $region20: #{tpu_custom_call.1} parent=0 // pred_region
    _
  $region21: #{tpu_custom_call.1} parent=0 // pred_fallthru
    _
  %v20 = vld [vmem:[%s0] sm:$0xff]
  %v21 = vld [vmem:[%s0 + $0x8] sm:$0xff]
  %v22 = vld [vmem:[%s0 + $0x10] sm:$0xff]
  %v23 = vld [vmem:[%s0 + $0x18] sm:$0xff]
  %v24 = vld [vmem:[%s0 + $0x20] sm:$0xff]
  %v25 = vld [vmem:[%s0 + $0x28] sm:$0xff]
  %v26 = vld [vmem:[%s0 + $0x30] sm:$0xff]
  %v27 = vld [vmem:[%s0 + $0x38] sm:$0xff]
  %v28 = vld [vmem:[%s0 + $0x40] sm:$0xff]
  %v29 = vld [vmem:[%s0 + $0x48] sm:$0xff]
  %v30 = vld [vmem:[%s0 + $0x50] sm:$0xff]
  %v31 = vld [vmem:[%s0 + $0x58] sm:$0xff]
  %v32 = vld [vmem:[%s0 + $0x60] sm:$0xff]
  %v33 = vld [vmem:[%s0 + $0x68] sm:$0xff]
  %v34 = vld [vmem:[%s0 + $0x70] sm:$0xff]
  %v35 = vld [vmem:[%s0 + $0x78] sm:$0xff]
  %v36 = vld [vmem:[%s1] sm:$0xff]
  %v37 = vld [vmem:[%s1 + $0x8] sm:$0xff]
  %v38 = vld [vmem:[%s1 + $0x10] sm:$0xff]
  %v39 = vld [vmem:[%s1 + $0x18] sm:$0xff]
  %v40 = vld [vmem:[%s2] sm:$0x1]
  %v42 = vlaneseq
  %v43 = vshrl.u32 %v42, 7
  %v44 = vsub.s32 0, %v43
  %v45 = vrot.slane %v40, %v44
  %vm47 = vcmask 261120
  %v49 = vsel %vm47, %v20, 0
  %v52 = vsel %vm47, %v21, 0
  %v55 = vsel %vm47, %v22, 0
  %v58 = vsel %vm47, %v23, 0
  %v61 = vsel %vm47, %v24, 0
  %v64 = vsel %vm47, %v25, 0
  %v67 = vsel %vm47, %v26, 0
  %v70 = vsel %vm47, %v27, 0
  %v73 = vsel %vm47, %v28, 0
  %v76 = vsel %vm47, %v29, 0
  %v79 = vsel %vm47, %v30, 0
  %v82 = vsel %vm47, %v31, 0
  %v85 = vsel %vm47, %v32, 0
  %v88 = vsel %vm47, %v33, 0
  %v91 = vsel %vm47, %v34, 0
  %v94 = vsel %vm47, %v35, 0
  %96 = vmatprep.subr.mxu0 0.0
  %97 = vmatpush1.msra.mxu0 0.0
  %98 = vmatprep.subr.mxu0 0.0
  %99 = vmatpush1.msra.mxu0 0.0
  %100 = vmatprep.subr.mxu0 0.0
  %101 = vmatpush1.msra.mxu0 0.0
  %102 = vmatprep.subr.mxu0 0.0
  %103 = vmatpush1.msra.mxu0 0.0
  %104 = vmatprep.subr.mxu0 0.0
  %105 = vmatpush1.msra.mxu0 0.0
  %106 = vmatprep.subr.mxu0 0.0
  %107 = vmatpush1.msra.mxu0 0.0
  %108 = vmatprep.subr.mxu0 0.0
  %109 = vmatpush1.msra.mxu0 0.0
  %110 = vmatprep.subr.mxu0 0.0
  %111 = vmatpush1.msra.mxu0 0.0
  %112 = vmatprep.subr.mxu0 0.0
  %113 = vmatpush1.msra.mxu0 0.0
  %114 = vmatprep.subr.mxu0 0.0
  %115 = vmatpush1.msra.mxu0 0.0
  %116 = vmatprep.subr.mxu0 0.0
  %117 = vmatpush1.msra.mxu0 0.0
  %118 = vmatprep.subr.mxu0 0.0
  %119 = vmatpush1.msra.mxu0 0.0
  %120 = vmatprep.subr.mxu0 0.0
  %121 = vmatpush1.msra.mxu0 %v39
  %122 = vmatprep.subr.mxu0 0.0
  %123 = vmatpush1.msra.mxu0 %v38
  %124 = vmatprep.subr.mxu0 0.0
  %125 = vmatpush1.msra.mxu0 %v37
  %126 = vmatprep.subr.mxu0 0.0
  %127 = vmatpush1.msra.mxu0 %v36
  %128 = vmatprep.subr.mxu0 0.0
  %129 = vmatpush2.msra.mxu0 0.0
  %130 = vmatprep.subr.mxu0 0.0
  %131 = vmatpush2.msra.mxu0 0.0
  %132 = vmatprep.subr.mxu0 0.0
  %133 = vmatpush2.msra.mxu0 0.0
  %134 = vmatprep.subr.mxu0 0.0
  %135 = vmatpush2.msra.mxu0 0.0
  %136 = vmatprep.subr.mxu0 0.0
  %137 = vmatpush2.msra.mxu0 0.0
  %138 = vmatprep.subr.mxu0 0.0
  %139 = vmatpush2.msra.mxu0 0.0
  %140 = vmatprep.subr.mxu0 0.0
  %141 = vmatpush2.msra.mxu0 0.0
  %142 = vmatprep.subr.mxu0 0.0
  %143 = vmatpush2.msra.mxu0 0.0
  %144 = vmatprep.subr.mxu0 0.0
  %145 = vmatpush2.msra.mxu0 0.0
  %146 = vmatprep.subr.mxu0 0.0
  %147 = vmatpush2.msra.mxu0 0.0
  %148 = vmatprep.subr.mxu0 0.0
  %149 = vmatpush2.msra.mxu0 0.0
  %150 = vmatprep.subr.mxu0 0.0
  %151 = vmatpush2.msra.mxu0 0.0
  %152 = vmatprep.subr.mxu0 0.0
  %153 = vmatpush2.msra.mxu0 0.0
  %154 = vmatprep.subr.mxu0 0.0
  %155 = vmatpush2.msra.mxu0 0.0
  %156 = vmatprep.subr.mxu0 0.0
  %157 = vmatpush2.msra.mxu0 0.0
  %158 = vmatprep.subr.mxu0 0.0
  %159 = vmatpush2.msra.mxu0 0.0
  %160 = vmatprep.mubr.f32.mxu0 0.0
  %161 = vmatmul.mubr.f32.gmra.mxu0 %v49
  %v162 = vpop.f32.mrf.mxu0
  %v163 = vadd.f32 %v45, %v162
  %v164 = vpop.f32.mrf.mxu0
  %165 = vmatprep.mubr.f32.mxu0 0.0
  %166 = vmatmul.mubr.f32.gmra.mxu0 %v52
  %v167 = vpop.f32.mrf.mxu0
  %v168 = vadd.f32 %v45, %v167
  %v169 = vpop.f32.mrf.mxu0
  %170 = vmatprep.mubr.f32.mxu0 0.0
  %171 = vmatmul.mubr.f32.gmra.mxu0 %v55
  %v172 = vpop.f32.mrf.mxu0
  %v173 = vadd.f32 %v45, %v172
  %v174 = vpop.f32.mrf.mxu0
  %175 = vmatprep.mubr.f32.mxu0 0.0
  %176 = vmatmul.mubr.f32.gmra.mxu0 %v58
  %v177 = vpop.f32.mrf.mxu0
  %v178 = vadd.f32 %v45, %v177
  %v179 = vpop.f32.mrf.mxu0
  %180 = vmatprep.mubr.f32.mxu0 0.0
  %181 = vmatmul.mubr.f32.gmra.mxu0 %v61
  %v182 = vpop.f32.mrf.mxu0
  %v183 = vadd.f32 %v45, %v182
  %v184 = vpop.f32.mrf.mxu0
  %185 = vmatprep.mubr.f32.mxu0 0.0
  %186 = vmatmul.mubr.f32.gmra.mxu0 %v64
  %v187 = vpop.f32.mrf.mxu0
  %v188 = vadd.f32 %v45, %v187
  %v189 = vpop.f32.mrf.mxu0
  %190 = vmatprep.mubr.f32.mxu0 0.0
  %191 = vmatmul.mubr.f32.gmra.mxu0 %v67
  %v192 = vpop.f32.mrf.mxu0
  %v193 = vadd.f32 %v45, %v192
  %v194 = vpop.f32.mrf.mxu0
  %195 = vmatprep.mubr.f32.mxu0 0.0
  %196 = vmatmul.mubr.f32.gmra.mxu0 %v70
  %v197 = vpop.f32.mrf.mxu0
  %v198 = vadd.f32 %v45, %v197
  %v199 = vpop.f32.mrf.mxu0
  %200 = vmatprep.mubr.f32.mxu0 0.0
  %201 = vmatmul.mubr.f32.gmra.mxu0 %v73
  %v202 = vpop.f32.mrf.mxu0
  %v203 = vadd.f32 %v45, %v202
  %v204 = vpop.f32.mrf.mxu0
  %205 = vmatprep.mubr.f32.mxu0 0.0
  %206 = vmatmul.mubr.f32.gmra.mxu0 %v76
  %v207 = vpop.f32.mrf.mxu0
  %v208 = vadd.f32 %v45, %v207
  %v209 = vpop.f32.mrf.mxu0
  %210 = vmatprep.mubr.f32.mxu0 0.0
  %211 = vmatmul.mubr.f32.gmra.mxu0 %v79
  %v212 = vpop.f32.mrf.mxu0
  %v213 = vadd.f32 %v45, %v212
  %v214 = vpop.f32.mrf.mxu0
  %215 = vmatprep.mubr.f32.mxu0 0.0
  %216 = vmatmul.mubr.f32.gmra.mxu0 %v82
  %v217 = vpop.f32.mrf.mxu0
  %v218 = vadd.f32 %v45, %v217
  %v219 = vpop.f32.mrf.mxu0
  %220 = vmatprep.mubr.f32.mxu0 0.0
  %221 = vmatmul.mubr.f32.gmra.mxu0 %v85
  %v222 = vpop.f32.mrf.mxu0
  %v223 = vadd.f32 %v45, %v222
  %v224 = vpop.f32.mrf.mxu0
  %225 = vmatprep.mubr.f32.mxu0 0.0
  %226 = vmatmul.mubr.f32.gmra.mxu0 %v88
  %v227 = vpop.f32.mrf.mxu0
  %v228 = vadd.f32 %v45, %v227
  %v229 = vpop.f32.mrf.mxu0
  %230 = vmatprep.mubr.f32.mxu0 0.0
  %231 = vmatmul.mubr.f32.gmra.mxu0 %v91
  %v232 = vpop.f32.mrf.mxu0
  %v233 = vadd.f32 %v45, %v232
  %v234 = vpop.f32.mrf.mxu0
  %235 = vmatprep.mubr.f32.mxu0 0.0
  %236 = vmatmul.mubr.f32.gmra.mxu0 %v94
  %v237 = vpop.f32.mrf.mxu0
  %v238 = vadd.f32 %v45, %v237
  %v239 = vpop.f32.mrf.mxu0
  %240 = vdwg.mxu0
  %v241 = vmul.f32 %v163, 0.5
  %v242 = vmul.f32 %v168, 0.5
  %v243 = vmul.f32 %v173, 0.5
  %v244 = vmul.f32 %v178, 0.5
  %v245 = vmul.f32 %v183, 0.5
  %v246 = vmul.f32 %v188, 0.5
  %v247 = vmul.f32 %v193, 0.5
  %v248 = vmul.f32 %v198, 0.5
  %v249 = vmul.f32 %v203, 0.5
  %v250 = vmul.f32 %v208, 0.5
  %v251 = vmul.f32 %v213, 0.5
  %v252 = vmul.f32 %v218, 0.5
  %v253 = vmul.f32 %v223, 0.5
  %v254 = vmul.f32 %v228, 0.5
  %v255 = vmul.f32 %v233, 0.5
  %v256 = vmul.f32 %v238, 0.5
  %v257 = vmul.f32 %v163, 0.70710677
  %v258 = vmul.f32 %v168, 0.70710677
  %v259 = vmul.f32 %v173, 0.70710677
  %v260 = vmul.f32 %v178, 0.70710677
  %v261 = vmul.f32 %v183, 0.70710677
  %v262 = vmul.f32 %v188, 0.70710677
  %v263 = vmul.f32 %v193, 0.70710677
  %v264 = vmul.f32 %v198, 0.70710677
  %v265 = vmul.f32 %v203, 0.70710677
  %v266 = vmul.f32 %v208, 0.70710677
  %v267 = vmul.f32 %v213, 0.70710677
  %v268 = vmul.f32 %v218, 0.70710677
  %v269 = vmul.f32 %v223, 0.70710677
  %v270 = vmul.f32 %v228, 0.70710677
  %v271 = vmul.f32 %v233, 0.70710677
  %v272 = vmul.f32 %v238, 0.70710677
  %v273 = verf.f32.pop %v257
  %v274 = verf.f32.pop %v258
  %v275 = verf.f32.pop %v259
  %v276 = verf.f32.pop %v260
  %v277 = verf.f32.pop %v261
  %v278 = verf.f32.pop %v262
  %v279 = verf.f32.pop %v263
  %v280 = verf.f32.pop %v264
  %v281 = verf.f32.pop %v265
  %v282 = verf.f32.pop %v266
  %v283 = verf.f32.pop %v267
  %v284 = verf.f32.pop %v268
  %v285 = verf.f32.pop %v269
  %v286 = verf.f32.pop %v270
  %v287 = verf.f32.pop %v271
  %v288 = verf.f32.pop %v272
  %v289 = vadd.f32 %v273, 1.0
  %v290 = vadd.f32 %v274, 1.0
  %v291 = vadd.f32 %v275, 1.0
  %v292 = vadd.f32 %v276, 1.0
  %v293 = vadd.f32 %v277, 1.0
  %v294 = vadd.f32 %v278, 1.0
  %v295 = vadd.f32 %v279, 1.0
  %v296 = vadd.f32 %v280, 1.0
  %v297 = vadd.f32 %v281, 1.0
  %v298 = vadd.f32 %v282, 1.0
  %v299 = vadd.f32 %v283, 1.0
  %v300 = vadd.f32 %v284, 1.0
  %v301 = vadd.f32 %v285, 1.0
  %v302 = vadd.f32 %v286, 1.0
  %v303 = vadd.f32 %v287, 1.0
  %v304 = vadd.f32 %v288, 1.0
  %v305 = vmul.f32 %v241, %v289
  %v306 = vmul.f32 %v242, %v290
  %v307 = vmul.f32 %v243, %v291
  %v308 = vmul.f32 %v244, %v292
  %v309 = vmul.f32 %v245, %v293
  %v310 = vmul.f32 %v246, %v294
  %v311 = vmul.f32 %v247, %v295
  %v312 = vmul.f32 %v248, %v296
  %v313 = vmul.f32 %v249, %v297
  %v314 = vmul.f32 %v250, %v298
  %v315 = vmul.f32 %v251, %v299
  %v316 = vmul.f32 %v252, %v300
  %v317 = vmul.f32 %v253, %v301
  %v318 = vmul.f32 %v254, %v302
  %v319 = vmul.f32 %v255, %v303
  %v320 = vmul.f32 %v256, %v304
  %v321 = vld [vmem:[%s3] sm:$0xff]
  %v322 = vld [vmem:[%s3 + $0x8] sm:$0xff]
  %v323 = vld [vmem:[%s3 + $0x10] sm:$0xff]
  %v324 = vld [vmem:[%s3 + $0x18] sm:$0xff]
  %v325 = vld [vmem:[%s3 + $0x20] sm:$0xff]
  %v326 = vld [vmem:[%s3 + $0x28] sm:$0xff]
  %v327 = vld [vmem:[%s3 + $0x30] sm:$0xff]
  %v328 = vld [vmem:[%s3 + $0x38] sm:$0xff]
  %v329 = vld [vmem:[%s3 + $0x40] sm:$0xff]
  %v330 = vld [vmem:[%s3 + $0x48] sm:$0xff]
  %v331 = vld [vmem:[%s3 + $0x50] sm:$0xff]
  %v332 = vld [vmem:[%s3 + $0x58] sm:$0xff]
  %v333 = vld [vmem:[%s3 + $0x60] sm:$0xff]
  %v334 = vld [vmem:[%s3 + $0x68] sm:$0xff]
  %v335 = vld [vmem:[%s3 + $0x70] sm:$0xff]
  %v336 = vld [vmem:[%s3 + $0x78] sm:$0xff]
  %v337 = vld [vmem:[%s4] sm:$0x1]
  %v339 = vlaneseq
  %v340 = vshrl.u32 %v339, 7
  %v341 = vsub.s32 0, %v340
  %v342 = vrot.slane %v337, %v341
  %344 = vmatprep.subr.mxu0 0.0
  %345 = vmatpush1.msra.mxu0 %v336
  %346 = vmatprep.subr.mxu0 0.0
  %347 = vmatpush1.msra.mxu0 %v335
  %348 = vmatprep.subr.mxu0 0.0
  %349 = vmatpush1.msra.mxu0 %v334
  %350 = vmatprep.subr.mxu0 0.0
  %351 = vmatpush1.msra.mxu0 %v333
  %352 = vmatprep.subr.mxu0 0.0
  %353 = vmatpush1.msra.mxu0 %v332
  %354 = vmatprep.subr.mxu0 0.0
  %355 = vmatpush1.msra.mxu0 %v331
  %356 = vmatprep.subr.mxu0 0.0
  %357 = vmatpush1.msra.mxu0 %v330
  %358 = vmatprep.subr.mxu0 0.0
  %359 = vmatpush1.msra.mxu0 %v329
  %360 = vmatprep.subr.mxu0 0.0
  %361 = vmatpush1.msra.mxu0 %v328
  %362 = vmatprep.subr.mxu0 0.0
  %363 = vmatpush1.msra.mxu0 %v327
  %364 = vmatprep.subr.mxu0 0.0
  %365 = vmatpush1.msra.mxu0 %v326
  %366 = vmatprep.subr.mxu0 0.0
  %367 = vmatpush1.msra.mxu0 %v325
  %368 = vmatprep.subr.mxu0 0.0
  %369 = vmatpush1.msra.mxu0 %v324
  %370 = vmatprep.subr.mxu0 0.0
  %371 = vmatpush1.msra.mxu0 %v323
  %372 = vmatprep.subr.mxu0 0.0
  %373 = vmatpush1.msra.mxu0 %v322
  %374 = vmatprep.subr.mxu0 0.0
  %375 = vmatpush1.msra.mxu0 %v321
  %376 = vmatprep.subr.mxu0 0.0
  %377 = vmatpush2.msra.mxu0 0.0
  %378 = vmatprep.subr.mxu0 0.0
  %379 = vmatpush2.msra.mxu0 0.0
  %380 = vmatprep.subr.mxu0 0.0
  %381 = vmatpush2.msra.mxu0 0.0
  %382 = vmatprep.subr.mxu0 0.0
  %383 = vmatpush2.msra.mxu0 0.0
  %384 = vmatprep.subr.mxu0 0.0
  %385 = vmatpush2.msra.mxu0 0.0
  %386 = vmatprep.subr.mxu0 0.0
  %387 = vmatpush2.msra.mxu0 0.0
  %388 = vmatprep.subr.mxu0 0.0
  %389 = vmatpush2.msra.mxu0 0.0
  %390 = vmatprep.subr.mxu0 0.0
  %391 = vmatpush2.msra.mxu0 0.0
  %392 = vmatprep.subr.mxu0 0.0
  %393 = vmatpush2.msra.mxu0 0.0
  %394 = vmatprep.subr.mxu0 0.0
  %395 = vmatpush2.msra.mxu0 0.0
  %396 = vmatprep.subr.mxu0 0.0
  %397 = vmatpush2.msra.mxu0 0.0
  %398 = vmatprep.subr.mxu0 0.0
  %399 = vmatpush2.msra.mxu0 0.0
  %400 = vmatprep.subr.mxu0 0.0
  %401 = vmatpush2.msra.mxu0 0.0
  %402 = vmatprep.subr.mxu0 0.0
  %403 = vmatpush2.msra.mxu0 0.0
  %404 = vmatprep.subr.mxu0 0.0
  %405 = vmatpush2.msra.mxu0 0.0
  %406 = vmatprep.subr.mxu0 0.0
  %407 = vmatpush2.msra.mxu0 0.0
  %408 = vmatprep.mubr.f32.mxu0 0.0
  %409 = vmatmul.mubr.f32.gmra.mxu0 %v305
  %v410 = vpop.f32.mrf.mxu0
  %v411 = vadd.f32 %v342, %v410
  %v412 = vpop.f32.mrf.mxu0
  %413 = vmatprep.mubr.f32.mxu0 0.0
  %414 = vmatmul.mubr.f32.gmra.mxu0 %v306
  %v415 = vpop.f32.mrf.mxu0
  %v416 = vadd.f32 %v342, %v415
  %v417 = vpop.f32.mrf.mxu0
  %418 = vmatprep.mubr.f32.mxu0 0.0
  %419 = vmatmul.mubr.f32.gmra.mxu0 %v307
  %v420 = vpop.f32.mrf.mxu0
  %v421 = vadd.f32 %v342, %v420
  %v422 = vpop.f32.mrf.mxu0
  %423 = vmatprep.mubr.f32.mxu0 0.0
  %424 = vmatmul.mubr.f32.gmra.mxu0 %v308
  %v425 = vpop.f32.mrf.mxu0
  %v426 = vadd.f32 %v342, %v425
  %v427 = vpop.f32.mrf.mxu0
  %428 = vmatprep.mubr.f32.mxu0 0.0
  %429 = vmatmul.mubr.f32.gmra.mxu0 %v309
  %v430 = vpop.f32.mrf.mxu0
  %v431 = vadd.f32 %v342, %v430
  %v432 = vpop.f32.mrf.mxu0
  %433 = vmatprep.mubr.f32.mxu0 0.0
  %434 = vmatmul.mubr.f32.gmra.mxu0 %v310
  %v435 = vpop.f32.mrf.mxu0
  %v436 = vadd.f32 %v342, %v435
  %v437 = vpop.f32.mrf.mxu0
  %438 = vmatprep.mubr.f32.mxu0 0.0
  %439 = vmatmul.mubr.f32.gmra.mxu0 %v311
  %v440 = vpop.f32.mrf.mxu0
  %v441 = vadd.f32 %v342, %v440
  %v442 = vpop.f32.mrf.mxu0
  %443 = vmatprep.mubr.f32.mxu0 0.0
  %444 = vmatmul.mubr.f32.gmra.mxu0 %v312
  %v445 = vpop.f32.mrf.mxu0
  %v446 = vadd.f32 %v342, %v445
  %v447 = vpop.f32.mrf.mxu0
  %448 = vmatprep.mubr.f32.mxu0 0.0
  %449 = vmatmul.mubr.f32.gmra.mxu0 %v313
  %v450 = vpop.f32.mrf.mxu0
  %v451 = vadd.f32 %v342, %v450
  %v452 = vpop.f32.mrf.mxu0
  %453 = vmatprep.mubr.f32.mxu0 0.0
  %454 = vmatmul.mubr.f32.gmra.mxu0 %v314
  %v455 = vpop.f32.mrf.mxu0
  %v456 = vadd.f32 %v342, %v455
  %v457 = vpop.f32.mrf.mxu0
  %458 = vmatprep.mubr.f32.mxu0 0.0
  %459 = vmatmul.mubr.f32.gmra.mxu0 %v315
  %v460 = vpop.f32.mrf.mxu0
  %v461 = vadd.f32 %v342, %v460
  %v462 = vpop.f32.mrf.mxu0
  %463 = vmatprep.mubr.f32.mxu0 0.0
  %464 = vmatmul.mubr.f32.gmra.mxu0 %v316
  %v465 = vpop.f32.mrf.mxu0
  %v466 = vadd.f32 %v342, %v465
  %v467 = vpop.f32.mrf.mxu0
  %468 = vmatprep.mubr.f32.mxu0 0.0
  %469 = vmatmul.mubr.f32.gmra.mxu0 %v317
  %v470 = vpop.f32.mrf.mxu0
  %v471 = vadd.f32 %v342, %v470
  %v472 = vpop.f32.mrf.mxu0
  %473 = vmatprep.mubr.f32.mxu0 0.0
  %474 = vmatmul.mubr.f32.gmra.mxu0 %v318
  %v475 = vpop.f32.mrf.mxu0
  %v476 = vadd.f32 %v342, %v475
  %v477 = vpop.f32.mrf.mxu0
  %478 = vmatprep.mubr.f32.mxu0 0.0
  %479 = vmatmul.mubr.f32.gmra.mxu0 %v319
  %v480 = vpop.f32.mrf.mxu0
  %v481 = vadd.f32 %v342, %v480
  %v482 = vpop.f32.mrf.mxu0
  %483 = vmatprep.mubr.f32.mxu0 0.0
  %484 = vmatmul.mubr.f32.gmra.mxu0 %v320
  %v485 = vpop.f32.mrf.mxu0
  %v486 = vadd.f32 %v342, %v485
  %v487 = vpop.f32.mrf.mxu0
  %488 = vdwg.mxu0
  %489 = vst.msk [vmem:[%s5] sm:$0xff] %vm47, %v411
  %490 = vst.msk [vmem:[%s5 + $0x8] sm:$0xff] %vm47, %v416
  %491 = vst.msk [vmem:[%s5 + $0x10] sm:$0xff] %vm47, %v421
  %492 = vst.msk [vmem:[%s5 + $0x18] sm:$0xff] %vm47, %v426
  %493 = vst.msk [vmem:[%s5 + $0x20] sm:$0xff] %vm47, %v431
  %494 = vst.msk [vmem:[%s5 + $0x28] sm:$0xff] %vm47, %v436
  %495 = vst.msk [vmem:[%s5 + $0x30] sm:$0xff] %vm47, %v441
  %496 = vst.msk [vmem:[%s5 + $0x38] sm:$0xff] %vm47, %v446
  %497 = vst.msk [vmem:[%s5 + $0x40] sm:$0xff] %vm47, %v451
  %498 = vst.msk [vmem:[%s5 + $0x48] sm:$0xff] %vm47, %v456
  %499 = vst.msk [vmem:[%s5 + $0x50] sm:$0xff] %vm47, %v461
  %500 = vst.msk [vmem:[%s5 + $0x58] sm:$0xff] %vm47, %v466
  %501 = vst.msk [vmem:[%s5 + $0x60] sm:$0xff] %vm47, %v471
  %502 = vst.msk [vmem:[%s5 + $0x68] sm:$0xff] %vm47, %v476
  %503 = vst.msk [vmem:[%s5 + $0x70] sm:$0xff] %vm47, %v481
  %504 = vst.msk [vmem:[%s5 + $0x78] sm:$0xff] %vm47, %v486
  // Predicated region
  $region22: #{tpu_custom_call.1} parent=0 // pred_check
    _
  $region23: #{tpu_custom_call.1} parent=0 // pred_check_branch
    %506 = sbr.rel (0) target = $region25
  $region24: #{tpu_custom_call.1} parent=0 // pred_region
    _
  $region25: #{tpu_custom_call.1} parent=0 // pred_fallthru
    _
  // Predicated region
  $region26: #{tpu_custom_call.1} parent=0 // pred_check
    _
  $region27: #{tpu_custom_call.1} parent=0 // pred_check_branch
    %508 = sbr.rel (0) target = $region29
  $region28: #{tpu_custom_call.1} parent=0 // pred_region
    _
  $region29: #{tpu_custom_call.1} parent=0 // pred_fallthru
    _

</llo_original>
